<compile_context>
chip_gen: v5e
topology: v5e:2x2
jax: 0.10.0
libtpu: 0.0.40
codegen_flags: <defaults>
</compile_context>

<pallas_src>
import functools

import jax
import jax.numpy as jnp
from jax.experimental import pallas as pl
from jax.experimental.pallas import tpu as pltpu

NEG_SLOPE = 0.01  # F.leaky_relu default negative_slope


def _leaky_relu(x):
    return jnp.where(x > 0, x, NEG_SLOPE * x)


def _round_up(n, m):
    return ((n + m - 1) // m) * m


def _default_bf16_elementwise():
    # bf16 VPU elementwise only helps on v6e/v7x (native bf16 ALUs); keep f32 on
    # older generations (v5e and earlier have no bf16 VALU).
    try:
        kind = jax.devices()[0].device_kind.lower()
    except Exception:
        return False
    return not any(tag in kind for tag in ("v2", "v3", "v4", "v5"))


def mlp_kernel(x_ref, w1a_ref, w1b_ref, b1_ref, w2_ref, b2_ref, w3_ref, b3_ref,
               o_ref, *, cdt):
    # Layer 1: lane-dense 128-wide MXU matmul (bf16 x bf16 -> f32 acc); the 129th
    # feature is a cheap VPU rank-1 update. Ref slices are free; cast is one pass.
    x128 = x_ref[:, :128].astype(jnp.bfloat16)          # (TB, 128)
    xe = x_ref[:, 128:129].astype(cdt)                  # (TB, 1)
    h1 = jnp.dot(x128, w1a_ref[...],
                 preferred_element_type=jnp.float32).astype(cdt)
    h1 = _leaky_relu(h1 + xe * w1b_ref[...] + b1_ref[...])
    # Layer 2: MXU with f32 accumulation; bias + activation in `cdt`.
    h2 = jnp.dot(h1.astype(jnp.bfloat16), w2_ref[...],
                 preferred_element_type=jnp.float32).astype(cdt)
    h2 = _leaky_relu(h2 + b2_ref[...])
    # Layer 3 (32 -> 1): trans_b matmul (1,32) x (TB,32)^T -> lane-dense (1, TB)
    # row directly on the (idle) MXU -- no sublane->lane relayout, no column stores.
    row = jax.lax.dot_general(
        w3_ref[...], h2.astype(jnp.bfloat16),
        dimension_numbers=(((1,), (1,)), ((), ())),
        preferred_element_type=jnp.float32)             # (1, TB) f32
    o_ref[...] = row + b3_ref[...]


@functools.partial(jax.jit, static_argnames=("tile_b", "bf16_elementwise"))
def _forward_jit(x, params, *, tile_b, bf16_elementwise):
    w1, b1, w2, b2, w3, b3 = params   # (129,32),(1,32),(32,32),(1,32),(32,1),(1,1)
    B, F = x.shape
    assert F == 129, f"expected 129 input features, got {F}"
    cdt = jnp.bfloat16 if bf16_elementwise else jnp.float32

    # TB is a multiple of 128 so the lane-dense (1, TB) output block is legal; the
    # grid handles non-divisible B via a (masked) partial last tile -- no jnp.pad.
    tile_b = max(128, _round_up(tile_b, 128))
    TB = min(tile_b, _round_up(B, 128))
    num_tiles = pl.cdiv(B, TB)

    # Tiny weight preps (a few KiB; done per call, negligible vs. x traffic).
    w1a = w1[:128].astype(jnp.bfloat16)                 # (128, 32) -> layer-1 MXU
    w1b = w1[128:129].astype(cdt)                       # (1, 32)   -> VPU rank-1
    b1c = jnp.reshape(b1, (1, 32)).astype(cdt)
    w2c = w2.astype(jnp.bfloat16)                       # (32, 32)  -> layer-2 MXU
    b2c = jnp.reshape(b2, (1, 32)).astype(cdt)
    w3r = jnp.reshape(w3, (1, 32)).astype(jnp.bfloat16)  # (1, 32)  -> layer-3 MXU
    b3r = jnp.reshape(b3, (1, 1)).astype(jnp.float32)

    tile_map = lambda i: (i, 0)
    const_map = lambda i: (0, 0)   # weights: block index never changes -> DMAed once
    out_map = lambda i: (0, i)     # lane-dense output row

    # VMEM budget from actual block sizes (129 f32 lanes pad to 256 in VMEM; the
    # (TB,32) intermediates lane-pad to 128). Safe on v7x's 64 MiB/TC.
    x_block_bytes = TB * 256 * 4
    out_block_bytes = 8 * TB * 4
    vmem_needed = (2 * x_block_bytes          # double-buffered x tile
                   + 2 * out_block_bytes      # double-buffered output row
                   + 12 * TB * 128 * 4        # lane-padded (TB,32) intermediates
                   + (2 << 20))               # weights + misc
    vmem_limit = int(min(max(vmem_needed, 32 << 20), 100 << 20))

    weight_args = (w1a, w1b, b1c, w2c, b2c, w3r, b3r)
    weight_bytes = sum(int(a.size) * a.dtype.itemsize for a in weight_args)
    flops = 2 * B * (128 * 32 + 32 * 32 + 32) + 10 * B * 32
    bytes_accessed = B * 129 * 4 + B * 4 + weight_bytes

    out = pl.pallas_call(
        functools.partial(mlp_kernel, cdt=cdt),
        out_shape=jax.ShapeDtypeStruct((1, B), jnp.float32),
        grid=(num_tiles,),
        in_specs=[
            pl.BlockSpec((TB, 129), tile_map),   # raw f32 x tile (double-buffered)
            pl.BlockSpec((128, 32), const_map),
            pl.BlockSpec((1, 32), const_map),
            pl.BlockSpec((1, 32), const_map),
            pl.BlockSpec((32, 32), const_map),
            pl.BlockSpec((1, 32), const_map),
            pl.BlockSpec((1, 32), const_map),
            pl.BlockSpec((1, 1), const_map),
        ],
        out_specs=pl.BlockSpec((1, TB), out_map),
        compiler_params=pltpu.CompilerParams(
            dimension_semantics=("parallel",),   # batch tiles across TCs (v7x)
            vmem_limit_bytes=vmem_limit,
        ),
        cost_estimate=pl.CostEstimate(
            flops=flops, transcendentals=0, bytes_accessed=bytes_accessed),
    )(x, *weight_args)
    return jnp.reshape(out, (B, 1))


def approximator_forward(x, params, *, tile_b=8192, bf16_elementwise=None):
    if bf16_elementwise is None:
        bf16_elementwise = _default_bf16_elementwise()
    return _forward_jit(x, params, tile_b=int(tile_b),
                        bf16_elementwise=bool(bf16_elementwise))


def init_params(key):
    # Deterministic init mimicking nn.Linear: U(-1/sqrt(fan_in), 1/sqrt(fan_in)).
    def linear(key, fan_in, fan_out):
        kw, kb = jax.random.split(key)
        bound = 1.0 / jnp.sqrt(fan_in)
        w = jax.random.uniform(kw, (fan_in, fan_out), jnp.float32, -bound, bound)
        b = jax.random.uniform(kb, (1, fan_out), jnp.float32, -bound, bound)
        return w, b

    k1, k2, k3 = jax.random.split(key, 3)
    w1, b1 = linear(k1, 129, 32)
    w2, b2 = linear(k2, 32, 32)
    w3, b3 = linear(k3, 32, 1)
    return (w1, b1, w2, b2, w3, b3)


def reference_forward(x, params):
    # Pure-f32 reference, faithful to the PyTorch module.
    w1, b1, w2, b2, w3, b3 = params
    h1 = x @ w1 + b1
    h1 = jnp.where(h1 > 0, h1, NEG_SLOPE * h1)
    h2 = h1 @ w2 + b2
    h2 = jnp.where(h2 > 0, h2, NEG_SLOPE * h2)
    return h2 @ w3 + b3


if __name__ == "__main__":
    key = jax.random.PRNGKey(0)
    kx, kp = jax.random.split(key)
    params = init_params(kp)

    # Small shape consistent with the module (in_features = 129).
    B = 8
    x = jax.random.normal(kx, (B, 129), jnp.float32)
    ref = reference_forward(x, params)
    for bf16_elem in (False, True):   # exercise both elementwise-precision modes
        out = jax.block_until_ready(
            approximator_forward(x, params, bf16_elementwise=bf16_elem))
        assert out.shape == (B, 1)
        assert bool(jnp.allclose(out, ref, atol=3e-2, rtol=3e-2)), (
            f"mismatch vs f32 reference (bf16_elementwise={bf16_elem})")

    # Multi-tile grid + ragged (non-divisible) last tile, no input padding.
    B2 = 300
    x2 = jax.random.normal(jax.random.PRNGKey(1), (B2, 129), jnp.float32)
    out2 = jax.block_until_ready(approximator_forward(x2, params, tile_b=256))
    ref2 = reference_forward(x2, params)
    assert out2.shape == (B2, 1)
    assert bool(jnp.allclose(out2, ref2, atol=3e-2, rtol=3e-2))

    print("KERNEL_OK")
</pallas_src>

<mosaic_0001>
module attributes {stable_mosaic.version = 11 : i64} {
  func.func @mlp_kernel(%arg0: i32, %arg1: memref<128x129xf32, #tpu.memory_space<vmem>>, %arg2: memref<128x32xbf16, #tpu.memory_space<vmem>>, %arg3: memref<1x32xf32, #tpu.memory_space<vmem>>, %arg4: memref<1x32xf32, #tpu.memory_space<vmem>>, %arg5: memref<32x32xbf16, #tpu.memory_space<vmem>>, %arg6: memref<1x32xf32, #tpu.memory_space<vmem>>, %arg7: memref<1x32xbf16, #tpu.memory_space<vmem>>, %arg8: memref<1x1xf32, #tpu.memory_space<vmem>>, %arg9: memref<1x128xf32, #tpu.memory_space<vmem>>) attributes {dimension_semantics = [#tpu.dimension_semantics<parallel>], iteration_bounds = array<i64: 1>, scalar_prefetch = 0 : i64, scratch_operands = 0 : i64, tpu.core_type = #tpu.core_type<tc>, window_params = [{transform_indices = @transform_0, window_bounds = array<i64: 128, 129>}, {pipeline_mode = #tpu.pipeline_mode<synchronous>, transform_indices = @transform_1, window_bounds = array<i64: 128, 32>}, {pipeline_mode = #tpu.pipeline_mode<synchronous>, transform_indices = @transform_2, window_bounds = array<i64: 1, 32>}, {pipeline_mode = #tpu.pipeline_mode<synchronous>, transform_indices = @transform_3, window_bounds = array<i64: 1, 32>}, {pipeline_mode = #tpu.pipeline_mode<synchronous>, transform_indices = @transform_4, window_bounds = array<i64: 32, 32>}, {pipeline_mode = #tpu.pipeline_mode<synchronous>, transform_indices = @transform_5, window_bounds = array<i64: 1, 32>}, {pipeline_mode = #tpu.pipeline_mode<synchronous>, transform_indices = @transform_6, window_bounds = array<i64: 1, 32>}, {pipeline_mode = #tpu.pipeline_mode<synchronous>, transform_indices = @transform_7, window_bounds = array<i64: 1, 1>}, {transform_indices = @transform_8, window_bounds = array<i64: 1, 128>}]} {
    %c0 = arith.constant 0 : index
    %c0_0 = arith.constant 0 : index
    %0 = vector.load %arg1[%c0, %c0_0] : memref<128x129xf32, #tpu.memory_space<vmem>>, vector<128x128xf32>
    %1 = arith.truncf %0 : vector<128x128xf32> to vector<128x128xbf16>
    %c0_1 = arith.constant 0 : index
    %c128 = arith.constant 128 : index
    %2 = vector.load %arg1[%c0_1, %c128] : memref<128x129xf32, #tpu.memory_space<vmem>>, vector<128x1xf32>
    %c0_2 = arith.constant 0 : index
    %c0_3 = arith.constant 0 : index
    %3 = vector.load %arg2[%c0_2, %c0_3] : memref<128x32xbf16, #tpu.memory_space<vmem>>, vector<128x32xbf16>
    %cst = arith.constant dense<0.000000e+00> : vector<128x32xf32>
    %4 = tpu.matmul %1, %3, %cst {dimension_numbers = #tpu.dot_dimension_numbers<[1], [0], [0], [1], [0, 0, 1, 1], [], []>} : vector<128x128xbf16>, vector<128x32xbf16>, vector<128x32xf32> -> vector<128x32xf32>
    %c0_4 = arith.constant 0 : index
    %c0_5 = arith.constant 0 : index
    %5 = vector.load %arg3[%c0_4, %c0_5] : memref<1x32xf32, #tpu.memory_space<vmem>>, vector<1x32xf32>
    %6 = vector.broadcast %2 : vector<128x1xf32> to vector<128x32xf32>
    %7 = vector.broadcast %5 : vector<1x32xf32> to vector<128x32xf32>
    %8 = arith.mulf %6, %7 : vector<128x32xf32>
    %9 = arith.addf %4, %8 : vector<128x32xf32>
    %c0_6 = arith.constant 0 : index
    %c0_7 = arith.constant 0 : index
    %10 = vector.load %arg4[%c0_6, %c0_7] : memref<1x32xf32, #tpu.memory_space<vmem>>, vector<1x32xf32>
    %11 = vector.broadcast %10 : vector<1x32xf32> to vector<128x32xf32>
    %12 = arith.addf %9, %11 : vector<128x32xf32>
    %cst_8 = arith.constant 0.000000e+00 : f32
    %13 = vector.broadcast %cst_8 : f32 to vector<128x32xf32>
    %14 = arith.cmpf ogt, %12, %13 : vector<128x32xf32>
    %cst_9 = arith.constant 0.00999999977 : f32
    %15 = vector.broadcast %cst_9 : f32 to vector<128x32xf32>
    %16 = arith.mulf %15, %12 : vector<128x32xf32>
    %17 = arith.select %14, %12, %16 : vector<128x32xi1>, vector<128x32xf32>
    %18 = arith.truncf %17 : vector<128x32xf32> to vector<128x32xbf16>
    %c0_10 = arith.constant 0 : index
    %c0_11 = arith.constant 0 : index
    %19 = vector.load %arg5[%c0_10, %c0_11] : memref<32x32xbf16, #tpu.memory_space<vmem>>, vector<32x32xbf16>
    %cst_12 = arith.constant dense<0.000000e+00> : vector<128x32xf32>
    %20 = tpu.matmul %18, %19, %cst_12 {dimension_numbers = #tpu.dot_dimension_numbers<[1], [0], [0], [1], [0, 0, 1, 1], [], []>} : vector<128x32xbf16>, vector<32x32xbf16>, vector<128x32xf32> -> vector<128x32xf32>
    %c0_13 = arith.constant 0 : index
    %c0_14 = arith.constant 0 : index
    %21 = vector.load %arg6[%c0_13, %c0_14] : memref<1x32xf32, #tpu.memory_space<vmem>>, vector<1x32xf32>
    %22 = vector.broadcast %21 : vector<1x32xf32> to vector<128x32xf32>
    %23 = arith.addf %20, %22 : vector<128x32xf32>
    %cst_15 = arith.constant 0.000000e+00 : f32
    %24 = vector.broadcast %cst_15 : f32 to vector<128x32xf32>
    %25 = arith.cmpf ogt, %23, %24 : vector<128x32xf32>
    %cst_16 = arith.constant 0.00999999977 : f32
    %26 = vector.broadcast %cst_16 : f32 to vector<128x32xf32>
    %27 = arith.mulf %26, %23 : vector<128x32xf32>
    %28 = arith.select %25, %23, %27 : vector<128x32xi1>, vector<128x32xf32>
    %c0_17 = arith.constant 0 : index
    %c0_18 = arith.constant 0 : index
    %29 = vector.load %arg7[%c0_17, %c0_18] : memref<1x32xbf16, #tpu.memory_space<vmem>>, vector<1x32xbf16>
    %30 = arith.truncf %28 : vector<128x32xf32> to vector<128x32xbf16>
    %cst_19 = arith.constant dense<0.000000e+00> : vector<1x128xf32>
    %31 = tpu.matmul %29, %30, %cst_19 {dimension_numbers = #tpu.dot_dimension_numbers<[1], [1], [0], [0], [0, 0, 1, 0], [], []>} : vector<1x32xbf16>, vector<128x32xbf16>, vector<1x128xf32> -> vector<1x128xf32>
    %c0_20 = arith.constant 0 : index
    %c0_21 = arith.constant 0 : index
    %32 = vector.load %arg8[%c0_20, %c0_21] : memref<1x1xf32, #tpu.memory_space<vmem>>, vector<1x1xf32>
    %33 = vector.broadcast %32 : vector<1x1xf32> to vector<1x128xf32>
    %34 = arith.addf %31, %33 : vector<1x128xf32>
    %c0_22 = arith.constant 0 : index
    %c0_23 = arith.constant 0 : index
    %35 = vector.load %arg9[%c0_22, %c0_23] : memref<1x128xf32, #tpu.memory_space<vmem>>, vector<1x128xf32>
    tpu.vector_store %arg9[%c0_22, %c0_23], %34 {strides = array<i32>} : memref<1x128xf32, #tpu.memory_space<vmem>>, vector<1x128xf32>,
    return
  }
  func.func @transform_0(%arg0: i32) -> (i32, i32) {
    %c0_i32 = arith.constant 0 : i32
    %c0_i32_0 = arith.constant 0 : i32
    return %arg0, %c0_i32 : i32, i32
  }
  func.func @transform_1(%arg0: i32) -> (i32, i32) {
    %c0_i32 = arith.constant 0 : i32
    %c0_i32_0 = arith.constant 0 : i32
    %c0_i32_1 = arith.constant 0 : i32
    return %c0_i32, %c0_i32_0 : i32, i32
  }
  func.func @transform_2(%arg0: i32) -> (i32, i32) {
    %c0_i32 = arith.constant 0 : i32
    %c0_i32_0 = arith.constant 0 : i32
    %c0_i32_1 = arith.constant 0 : i32
    return %c0_i32, %c0_i32_0 : i32, i32
  }
  func.func @transform_3(%arg0: i32) -> (i32, i32) {
    %c0_i32 = arith.constant 0 : i32
    %c0_i32_0 = arith.constant 0 : i32
    %c0_i32_1 = arith.constant 0 : i32
    return %c0_i32, %c0_i32_0 : i32, i32
  }
  func.func @transform_4(%arg0: i32) -> (i32, i32) {
    %c0_i32 = arith.constant 0 : i32
    %c0_i32_0 = arith.constant 0 : i32
    %c0_i32_1 = arith.constant 0 : i32
    return %c0_i32, %c0_i32_0 : i32, i32
  }
  func.func @transform_5(%arg0: i32) -> (i32, i32) {
    %c0_i32 = arith.constant 0 : i32
    %c0_i32_0 = arith.constant 0 : i32
    %c0_i32_1 = arith.constant 0 : i32
    return %c0_i32, %c0_i32_0 : i32, i32
  }
  func.func @transform_6(%arg0: i32) -> (i32, i32) {
    %c0_i32 = arith.constant 0 : i32
    %c0_i32_0 = arith.constant 0 : i32
    %c0_i32_1 = arith.constant 0 : i32
    return %c0_i32, %c0_i32_0 : i32, i32
  }
  func.func @transform_7(%arg0: i32) -> (i32, i32) {
    %c0_i32 = arith.constant 0 : i32
    %c0_i32_0 = arith.constant 0 : i32
    %c0_i32_1 = arith.constant 0 : i32
    return %c0_i32, %c0_i32_0 : i32, i32
  }
  func.func @transform_8(%arg0: i32) -> (i32, i32) {
    %c0_i32 = arith.constant 0 : i32
    %c0_i32_0 = arith.constant 0 : i32
    return %c0_i32, %arg0 : i32, i32
  }
}

</mosaic_0001>

<llo_original>
// kernel: _forward_jit.1
$region0: #{_forward_jit.1}
  #allocation0 [shape = 'u32[]', space=smem, size = 0x4, offset = 0x4, fixed_abs, tag = 'smem constant byte address 0x4 - core index']
  #allocation1 [shape = 'u32[72,128]{1,0:T(1,128)}', space=vmem, size = 0x9000, scoped, tag = 'internal scratch']
  #allocation2 [shape = 'f32[1,1]{1,0:T(1,128)S(1)}', space=vmem, size = 0x200, scoped, tag = 'scoped memory for _forward_jit.1']
  %s0 = inlined_call_operand.vmem [shape: f32[8,129], index: 0, kind: input, shape index: {}]
  %s1 = inlined_call_operand.vmem [shape: bf16[128,32], index: 1, kind: input, shape index: {}]
  %s2 = inlined_call_operand.vmem [shape: f32[1,32], index: 2, kind: input, shape index: {}]
  %s3 = inlined_call_operand.vmem [shape: f32[1,32], index: 3, kind: input, shape index: {}]
  %s4 = inlined_call_operand.vmem [shape: bf16[32,32], index: 4, kind: input, shape index: {}]
  %s5 = inlined_call_operand.vmem [shape: f32[1,32], index: 5, kind: input, shape index: {}]
  %s6 = inlined_call_operand.vmem [shape: bf16[1,32], index: 6, kind: input, shape index: {}]
  %s7 = inlined_call_operand.<no memory space> [shape: f32[1,1], index: 7, kind: input, shape index: {}]
  %s8 = inlined_call_operand.hbm [shape: f32[1,8], index: 8, kind: output, shape index: {}]
  %s9 = sld [smem:[#allocation0]]
  $region42: #{_forward_jit.1} parent=0
    _
  %s11 = ssub.s32 1, %s9
  %s12 = scalar_select 0, %s11, %s9
  %v13 = vstv %s7
  %14 = vst [vmem:[#allocation2] sm:$0x1] %v13
  $region1: #{_forward_jit.1} parent=0
    #allocation3 [shape = 'u8[512]{0}', space=vmem, size = 0x400, scoped, tag = 'output window, operand 0, single buffered']
    #allocation4 [shape = 's32[1]{0}', space=sflag, size = 0x4, scoped, tag = 'scoped memory for _forward_jit.1']
    %15 = vsyncpa [#allocation4], 0
    // Predicated region
    $region2: #{_forward_jit.1} parent=1 // pred_check
      _
    $region3: #{_forward_jit.1} parent=1 // pred_check_branch
      %17 = sbr.rel (0) target = $region5
    $region4: #{_forward_jit.1} parent=1 // pred_region
      _
    $region5: #{_forward_jit.1} parent=1 // pred_fallthru
      _
    // Predicated region
    $region6: #{_forward_jit.1} parent=1 // pred_check
      _
    $region7: #{_forward_jit.1} parent=1 // pred_check_branch
      %19 = sbr.rel (0) target = $region9
    $region8: #{_forward_jit.1} parent=1 // pred_region
      _
    $region9: #{_forward_jit.1} parent=1 // pred_fallthru
      _
    // Predicated region
    $region10: #{_forward_jit.1} parent=1 // pred_check
      _
    $region11: #{_forward_jit.1} parent=1 // pred_check_branch
      %21 = sbr.rel (0) target = $region13
    $region12: #{_forward_jit.1} parent=1 // pred_region
      _
    $region13: #{_forward_jit.1} parent=1 // pred_fallthru
      _
    // Predicated region
    $region14: #{_forward_jit.1} parent=1 // pred_check
      _
    $region15: #{_forward_jit.1} parent=1 // pred_check_branch
      %23 = sbr.rel (0) target = $region17
    $region16: #{_forward_jit.1} parent=1 // pred_region
      _
    $region17: #{_forward_jit.1} parent=1 // pred_fallthru
      _
    // Predicated region
    $region18: #{_forward_jit.1} parent=1 // pred_check
      _
    $region19: #{_forward_jit.1} parent=1 // pred_check_branch
      %25 = sbr.rel (0) target = $region21
    $region20: #{_forward_jit.1} parent=1 // pred_region
      _
    $region21: #{_forward_jit.1} parent=1 // pred_fallthru
      _
    // Predicated region
    $region22: #{_forward_jit.1} parent=1 // pred_check
      _
    $region23: #{_forward_jit.1} parent=1 // pred_check_branch
      %27 = sbr.rel (0) target = $region25
    $region24: #{_forward_jit.1} parent=1 // pred_region
      _
    $region25: #{_forward_jit.1} parent=1 // pred_fallthru
      _
    // Predicated region
    $region26: #{_forward_jit.1} parent=1 // pred_check
      _
    $region27: #{_forward_jit.1} parent=1 // pred_check_branch
      %29 = sbr.rel (0) target = $region29
    $region28: #{_forward_jit.1} parent=1 // pred_region
      _
    $region29: #{_forward_jit.1} parent=1 // pred_fallthru
      _
    // Predicated region
    $region30: #{_forward_jit.1} parent=1 // pred_check
      _
    $region31: #{_forward_jit.1} parent=1 // pred_check_branch
      %31 = sbr.rel (0) target = $region33
    $region32: #{_forward_jit.1} parent=1 // pred_region
      _
    $region33: #{_forward_jit.1} parent=1 // pred_fallthru
      _
    %v33 = vld [vmem:[%s0] sm:$0xff]
    %v34 = vld [vmem:[%s0 + $0x10] sm:$0xff]
    %v35 = vld [vmem:[%s0 + $0x20] sm:$0xff]
    %v36 = vld [vmem:[%s0 + $0x30] sm:$0xff]
    %v37 = vld [vmem:[%s0 + $0x40] sm:$0xff]
    %v38 = vld [vmem:[%s0 + $0x50] sm:$0xff]
    %v39 = vld [vmem:[%s0 + $0x60] sm:$0xff]
    %v40 = vld [vmem:[%s0 + $0x70] sm:$0xff]
    %v41 = vld [vmem:[%s0 + $0x80] sm:$0xff]
    %v42 = vld [vmem:[%s0 + $0x90] sm:$0xff]
    %v43 = vld [vmem:[%s0 + $0xa0] sm:$0xff]
    %v44 = vld [vmem:[%s0 + $0xb0] sm:$0xff]
    %v45 = vld [vmem:[%s0 + $0xc0] sm:$0xff]
    %v46 = vld [vmem:[%s0 + $0xd0] sm:$0xff]
    %v47 = vld [vmem:[%s0 + $0xe0] sm:$0xff]
    %v48 = vld [vmem:[%s0 + $0xf0] sm:$0xff]
    %v49 = vpack.c.bf16 %v34, %v33
    %v50 = vpack.c.bf16 %v36, %v35
    %v51 = vpack.c.bf16 %v38, %v37
    %v52 = vpack.c.bf16 %v40, %v39
    %v53 = vpack.c.bf16 %v42, %v41
    %v54 = vpack.c.bf16 %v44, %v43
    %v55 = vpack.c.bf16 %v46, %v45
    %v56 = vpack.c.bf16 %v48, %v47
    %v57 = vld [vmem:[%s0 + $0x8] sm:$0xff]
    %v58 = vld [vmem:[%s0 + $0x18] sm:$0xff]
    %v59 = vld [vmem:[%s0 + $0x28] sm:$0xff]
    %v60 = vld [vmem:[%s0 + $0x38] sm:$0xff]
    %v61 = vld [vmem:[%s0 + $0x48] sm:$0xff]
    %v62 = vld [vmem:[%s0 + $0x58] sm:$0xff]
    %v63 = vld [vmem:[%s0 + $0x68] sm:$0xff]
    %v64 = vld [vmem:[%s0 + $0x78] sm:$0xff]
    %v65 = vld [vmem:[%s0 + $0x88] sm:$0xff]
    %v66 = vld [vmem:[%s0 + $0x98] sm:$0xff]
    %v67 = vld [vmem:[%s0 + $0xa8] sm:$0xff]
    %v68 = vld [vmem:[%s0 + $0xb8] sm:$0xff]
    %v69 = vld [vmem:[%s0 + $0xc8] sm:$0xff]
    %v70 = vld [vmem:[%s0 + $0xd8] sm:$0xff]
    %v71 = vld [vmem:[%s0 + $0xe8] sm:$0xff]
    %v72 = vld [vmem:[%s0 + $0xf8] sm:$0xff]
    %v73 = vld [vmem:[%s1] sm:$0xf]
    %v74 = vld [vmem:[%s1 + $0x4] sm:$0xf]
    %v75 = vld [vmem:[%s1 + $0x8] sm:$0xf]
    %v76 = vld [vmem:[%s1 + $0xc] sm:$0xf]
    %v77 = vld [vmem:[%s1 + $0x10] sm:$0xf]
    %v78 = vld [vmem:[%s1 + $0x14] sm:$0xf]
    %v79 = vld [vmem:[%s1 + $0x18] sm:$0xf]
    %v80 = vld [vmem:[%s1 + $0x1c] sm:$0xf]
    %v81 = vld [vmem:[%s1 + $0x20] sm:$0xf]
    %v82 = vld [vmem:[%s1 + $0x24] sm:$0xf]
    %v83 = vld [vmem:[%s1 + $0x28] sm:$0xf]
    %v84 = vld [vmem:[%s1 + $0x2c] sm:$0xf]
    %v85 = vld [vmem:[%s1 + $0x30] sm:$0xf]
    %v86 = vld [vmem:[%s1 + $0x34] sm:$0xf]
    %v87 = vld [vmem:[%s1 + $0x38] sm:$0xf]
    %v88 = vld [vmem:[%s1 + $0x3c] sm:$0xf]
    %v89 = vld [vmem:[%s2] sm:$0x1]
    %91 = vset.pattern.permute.xlu0 0
    %92 = vperm.xlu0 %91, %v57
    %v93 = vpop.permute.xlu0 %92
    %96 = vset.pattern.permute.xlu0 0
    %97 = vperm.xlu0 %96, %v58
    %v98 = vpop.permute.xlu0 %97
    %101 = vset.pattern.permute.xlu0 0
    %102 = vperm.xlu0 %101, %v59
    %v103 = vpop.permute.xlu0 %102
    %106 = vset.pattern.permute.xlu0 0
    %107 = vperm.xlu0 %106, %v60
    %v108 = vpop.permute.xlu0 %107
    %111 = vset.pattern.permute.xlu0 0
    %112 = vperm.xlu0 %111, %v61
    %v113 = vpop.permute.xlu0 %112
    %116 = vset.pattern.permute.xlu0 0
    %117 = vperm.xlu0 %116, %v62
    %v118 = vpop.permute.xlu0 %117
    %121 = vset.pattern.permute.xlu0 0
    %122 = vperm.xlu0 %121, %v63
    %v123 = vpop.permute.xlu0 %122
    %126 = vset.pattern.permute.xlu0 0
    %127 = vperm.xlu0 %126, %v64
    %v128 = vpop.permute.xlu0 %127
    %131 = vset.pattern.permute.xlu0 0
    %132 = vperm.xlu0 %131, %v65
    %v133 = vpop.permute.xlu0 %132
    %136 = vset.pattern.permute.xlu0 0
    %137 = vperm.xlu0 %136, %v66
    %v138 = vpop.permute.xlu0 %137
    %141 = vset.pattern.permute.xlu0 0
    %142 = vperm.xlu0 %141, %v67
    %v143 = vpop.permute.xlu0 %142
    %146 = vset.pattern.permute.xlu0 0
    %147 = vperm.xlu0 %146, %v68
    %v148 = vpop.permute.xlu0 %147
    %151 = vset.pattern.permute.xlu0 0
    %152 = vperm.xlu0 %151, %v69
    %v153 = vpop.permute.xlu0 %152
    %156 = vset.pattern.permute.xlu0 0
    %157 = vperm.xlu0 %156, %v70
    %v158 = vpop.permute.xlu0 %157
    %161 = vset.pattern.permute.xlu0 0
    %162 = vperm.xlu0 %161, %v71
    %v163 = vpop.permute.xlu0 %162
    %166 = vset.pattern.permute.xlu0 0
    %167 = vperm.xlu0 %166, %v72
    %v168 = vpop.permute.xlu0 %167
    %v171 = vperm.slane %v89, 0
    %v173 = vmul.f32 %v93, %v171
    %v174 = vmul.f32 %v98, %v171
    %v175 = vmul.f32 %v103, %v171
    %v176 = vmul.f32 %v108, %v171
    %v177 = vmul.f32 %v113, %v171
    %v178 = vmul.f32 %v118, %v171
    %v179 = vmul.f32 %v123, %v171
    %v180 = vmul.f32 %v128, %v171
    %v181 = vmul.f32 %v133, %v171
    %v182 = vmul.f32 %v138, %v171
    %v183 = vmul.f32 %v143, %v171
    %v184 = vmul.f32 %v148, %v171
    %v185 = vmul.f32 %v153, %v171
    %v186 = vmul.f32 %v158, %v171
    %v187 = vmul.f32 %v163, %v171
    %v188 = vmul.f32 %v168, %v171
    %v205 = vunpack.c.l.b16 %v73
    %v206 = vunpack.c.l.b16 %v74
    %v207 = vunpack.c.l.b16 %v75
    %v208 = vunpack.c.l.b16 %v76
    %v209 = vunpack.c.l.b16 %v77
    %v210 = vunpack.c.l.b16 %v78
    %v211 = vunpack.c.l.b16 %v79
    %v212 = vunpack.c.l.b16 %v80
    %v213 = vunpack.c.l.b16 %v81
    %v214 = vunpack.c.l.b16 %v82
    %v215 = vunpack.c.l.b16 %v83
    %v216 = vunpack.c.l.b16 %v84
    %v217 = vunpack.c.l.b16 %v85
    %v218 = vunpack.c.l.b16 %v86
    %v219 = vunpack.c.l.b16 %v87
    %v220 = vunpack.c.l.b16 %v88
    %v221 = vpack.c.b16 %v206, %v205
    %v222 = vpack.c.b16 %v208, %v207
    %v223 = vpack.c.b16 %v210, %v209
    %v224 = vpack.c.b16 %v212, %v211
    %v225 = vpack.c.b16 %v214, %v213
    %v226 = vpack.c.b16 %v216, %v215
    %v227 = vpack.c.b16 %v218, %v217
    %v228 = vpack.c.b16 %v220, %v219
    %237 = vmatpush.bf16.msra.mxu0 %v228
    %238 = vmatpush.bf16.msra.mxu0 %v227
    %239 = vmatpush.bf16.msra.mxu0 %v226
    %240 = vmatpush.bf16.msra.mxu0 %v225
    %241 = vmatpush.bf16.msra.mxu0 %v224
    %242 = vmatpush.bf16.msra.mxu0 %v223
    %243 = vmatpush.bf16.msra.mxu0 %v222
    %244 = vmatpush.bf16.msra.mxu0 %v221
    %245 = vmatmul.bf16.gmra.mxu0 %v49
    %v246 = vpop.f32.mrf.mxu0
    %v247 = vadd.f32 %v173, %v246
    %v248 = vpop.f32.mrf.mxu0
    %v249 = vadd.f32 %v174, %v248
    %250 = vmatmul.bf16.gmra.mxu0 %v50
    %v251 = vpop.f32.mrf.mxu0
    %v252 = vadd.f32 %v175, %v251
    %v253 = vpop.f32.mrf.mxu0
    %v254 = vadd.f32 %v176, %v253
    %255 = vmatmul.bf16.gmra.mxu0 %v51
    %v256 = vpop.f32.mrf.mxu0
    %v257 = vadd.f32 %v177, %v256
    %v258 = vpop.f32.mrf.mxu0
    %v259 = vadd.f32 %v178, %v258
    %260 = vmatmul.bf16.gmra.mxu0 %v52
    %v261 = vpop.f32.mrf.mxu0
    %v262 = vadd.f32 %v179, %v261
    %v263 = vpop.f32.mrf.mxu0
    %v264 = vadd.f32 %v180, %v263
    %265 = vmatmul.bf16.gmra.mxu0 %v53
    %v266 = vpop.f32.mrf.mxu0
    %v267 = vadd.f32 %v181, %v266
    %v268 = vpop.f32.mrf.mxu0
    %v269 = vadd.f32 %v182, %v268
    %270 = vmatmul.bf16.gmra.mxu0 %v54
    %v271 = vpop.f32.mrf.mxu0
    %v272 = vadd.f32 %v183, %v271
    %v273 = vpop.f32.mrf.mxu0
    %v274 = vadd.f32 %v184, %v273
    %275 = vmatmul.bf16.gmra.mxu0 %v55
    %v276 = vpop.f32.mrf.mxu0
    %v277 = vadd.f32 %v185, %v276
    %v278 = vpop.f32.mrf.mxu0
    %v279 = vadd.f32 %v186, %v278
    %280 = vmatmul.bf16.gmra.mxu0 %v56
    %v281 = vpop.f32.mrf.mxu0
    %v282 = vadd.f32 %v187, %v281
    %v283 = vpop.f32.mrf.mxu0
    %v284 = vadd.f32 %v188, %v283
    %285 = vdwg.mxu0
    %v286 = vld [vmem:[%s3] sm:$0x1]
    %v288 = vperm.slane %v286, 0
    %v290 = vadd.f32 %v247, %v288
    %v291 = vadd.f32 %v249, %v288
    %v292 = vadd.f32 %v252, %v288
    %v293 = vadd.f32 %v254, %v288
    %v294 = vadd.f32 %v257, %v288
    %v295 = vadd.f32 %v259, %v288
    %v296 = vadd.f32 %v262, %v288
    %v297 = vadd.f32 %v264, %v288
    %v298 = vadd.f32 %v267, %v288
    %v299 = vadd.f32 %v269, %v288
    %v300 = vadd.f32 %v272, %v288
    %v301 = vadd.f32 %v274, %v288
    %v302 = vadd.f32 %v277, %v288
    %v303 = vadd.f32 %v279, %v288
    %v304 = vadd.f32 %v282, %v288
    %v305 = vadd.f32 %v284, %v288
    %vm306 = vcmp.gt.f32.partialorder %v290, 0.0
    %vm307 = vcmp.gt.f32.partialorder %v291, 0.0
    %vm308 = vcmp.gt.f32.partialorder %v292, 0.0
    %vm309 = vcmp.gt.f32.partialorder %v293, 0.0
    %vm310 = vcmp.gt.f32.partialorder %v294, 0.0
    %vm311 = vcmp.gt.f32.partialorder %v295, 0.0
    %vm312 = vcmp.gt.f32.partialorder %v296, 0.0
    %vm313 = vcmp.gt.f32.partialorder %v297, 0.0
    %vm314 = vcmp.gt.f32.partialorder %v298, 0.0
    %vm315 = vcmp.gt.f32.partialorder %v299, 0.0
    %vm316 = vcmp.gt.f32.partialorder %v300, 0.0
    %vm317 = vcmp.gt.f32.partialorder %v301, 0.0
    %vm318 = vcmp.gt.f32.partialorder %v302, 0.0
    %vm319 = vcmp.gt.f32.partialorder %v303, 0.0
    %vm320 = vcmp.gt.f32.partialorder %v304, 0.0
    %vm321 = vcmp.gt.f32.partialorder %v305, 0.0
    %v322 = vmul.f32 %v290, 0.01
    %v323 = vmul.f32 %v291, 0.01
    %v324 = vmul.f32 %v292, 0.01
    %v325 = vmul.f32 %v293, 0.01
    %v326 = vmul.f32 %v294, 0.01
    %v327 = vmul.f32 %v295, 0.01
    %v328 = vmul.f32 %v296, 0.01
    %v329 = vmul.f32 %v297, 0.01
    %v330 = vmul.f32 %v298, 0.01
    %v331 = vmul.f32 %v299, 0.01
    %v332 = vmul.f32 %v300, 0.01
    %v333 = vmul.f32 %v301, 0.01
    %v334 = vmul.f32 %v302, 0.01
    %v335 = vmul.f32 %v303, 0.01
    %v336 = vmul.f32 %v304, 0.01
    %v337 = vmul.f32 %v305, 0.01
    %v338 = vsel %vm306, %v290, %v322
    %v339 = vsel %vm307, %v291, %v323
    %v340 = vsel %vm308, %v292, %v324
    %v341 = vsel %vm309, %v293, %v325
    %v342 = vsel %vm310, %v294, %v326
    %v343 = vsel %vm311, %v295, %v327
    %v344 = vsel %vm312, %v296, %v328
    %v345 = vsel %vm313, %v297, %v329
    %v346 = vsel %vm314, %v298, %v330
    %v347 = vsel %vm315, %v299, %v331
    %v348 = vsel %vm316, %v300, %v332
    %v349 = vsel %vm317, %v301, %v333
    %v350 = vsel %vm318, %v302, %v334
    %v351 = vsel %vm319, %v303, %v335
    %v352 = vsel %vm320, %v304, %v336
    %v353 = vsel %vm321, %v305, %v337
    %v354 = vpack.c.bf16 %v339, %v338
    %v355 = vpack.c.bf16 %v341, %v340
    %v356 = vpack.c.bf16 %v343, %v342
    %v357 = vpack.c.bf16 %v345, %v344
    %v358 = vpack.c.bf16 %v347, %v346
    %v359 = vpack.c.bf16 %v349, %v348
    %v360 = vpack.c.bf16 %v351, %v350
    %v361 = vpack.c.bf16 %v353, %v352
    %v362 = vld [vmem:[%s4] sm:$0xf]
    %v363 = vld [vmem:[%s4 + $0x4] sm:$0xf]
    %v364 = vld [vmem:[%s4 + $0x8] sm:$0xf]
    %v365 = vld [vmem:[%s4 + $0xc] sm:$0xf]
    %v366 = vld [vmem:[%s5] sm:$0x1]
    %v368 = vperm.slane %v366, 0
    %v374 = vunpack.c.l.b16 %v362
    %v375 = vunpack.c.l.b16 %v363
    %v376 = vunpack.c.l.b16 %v364
    %v377 = vunpack.c.l.b16 %v365
    %v378 = vpack.c.b16 %v375, %v374
    %v379 = vpack.c.b16 %v377, %v376
    %vm382 = vcmask 261120
    %v384 = vsel %vm382, %v354, 0
    %v387 = vsel %vm382, %v355, 0
    %v390 = vsel %vm382, %v356, 0
    %v393 = vsel %vm382, %v357, 0
    %v396 = vsel %vm382, %v358, 0
    %v399 = vsel %vm382, %v359, 0
    %v402 = vsel %vm382, %v360, 0
    %v405 = vsel %vm382, %v361, 0
    %407 = vmatpush.bf16.msra.mxu0 0
    %408 = vmatpush.bf16.msra.mxu0 0
    %409 = vmatpush.bf16.msra.mxu0 0
    %410 = vmatpush.bf16.msra.mxu0 0
    %411 = vmatpush.bf16.msra.mxu0 0
    %412 = vmatpush.bf16.msra.mxu0 0
    %413 = vmatpush.bf16.msra.mxu0 %v379
    %414 = vmatpush.bf16.msra.mxu0 %v378
    %415 = vmatmul.bf16.gmra.mxu0 %v384
    %v416 = vpop.f32.mrf.mxu0
    %v417 = vadd.f32 %v368, %v416
    %v418 = vpop.f32.mrf.mxu0
    %v419 = vadd.f32 %v368, %v418
    %420 = vmatmul.bf16.gmra.mxu0 %v387
    %v421 = vpop.f32.mrf.mxu0
    %v422 = vadd.f32 %v368, %v421
    %v423 = vpop.f32.mrf.mxu0
    %v424 = vadd.f32 %v368, %v423
    %425 = vmatmul.bf16.gmra.mxu0 %v390
    %v426 = vpop.f32.mrf.mxu0
    %v427 = vadd.f32 %v368, %v426
    %v428 = vpop.f32.mrf.mxu0
    %v429 = vadd.f32 %v368, %v428
    %430 = vmatmul.bf16.gmra.mxu0 %v393
    %v431 = vpop.f32.mrf.mxu0
    %v432 = vadd.f32 %v368, %v431
    %v433 = vpop.f32.mrf.mxu0
    %v434 = vadd.f32 %v368, %v433
    %435 = vmatmul.bf16.gmra.mxu0 %v396
    %v436 = vpop.f32.mrf.mxu0
    %v437 = vadd.f32 %v368, %v436
    %v438 = vpop.f32.mrf.mxu0
    %v439 = vadd.f32 %v368, %v438
    %440 = vmatmul.bf16.gmra.mxu0 %v399
    %v441 = vpop.f32.mrf.mxu0
    %v442 = vadd.f32 %v368, %v441
    %v443 = vpop.f32.mrf.mxu0
    %v444 = vadd.f32 %v368, %v443
    %445 = vmatmul.bf16.gmra.mxu0 %v402
    %v446 = vpop.f32.mrf.mxu0
    %v447 = vadd.f32 %v368, %v446
    %v448 = vpop.f32.mrf.mxu0
    %v449 = vadd.f32 %v368, %v448
    %450 = vmatmul.bf16.gmra.mxu0 %v405
    %v451 = vpop.f32.mrf.mxu0
    %v452 = vadd.f32 %v368, %v451
    %v453 = vpop.f32.mrf.mxu0
    %v454 = vadd.f32 %v368, %v453
    %455 = vdwg.mxu0
    %vm456 = vcmp.gt.f32.partialorder %v417, 0.0
    %vm457 = vcmp.gt.f32.partialorder %v419, 0.0
    %vm458 = vcmp.gt.f32.partialorder %v422, 0.0
    %vm459 = vcmp.gt.f32.partialorder %v424, 0.0
    %vm460 = vcmp.gt.f32.partialorder %v427, 0.0
    %vm461 = vcmp.gt.f32.partialorder %v429, 0.0
    %vm462 = vcmp.gt.f32.partialorder %v432, 0.0
    %vm463 = vcmp.gt.f32.partialorder %v434, 0.0
    %vm464 = vcmp.gt.f32.partialorder %v437, 0.0
    %vm465 = vcmp.gt.f32.partialorder %v439, 0.0
    %vm466 = vcmp.gt.f32.partialorder %v442, 0.0
    %vm467 = vcmp.gt.f32.partialorder %v444, 0.0
    %vm468 = vcmp.gt.f32.partialorder %v447, 0.0
    %vm469 = vcmp.gt.f32.partialorder %v449, 0.0
    %vm470 = vcmp.gt.f32.partialorder %v452, 0.0
    %vm471 = vcmp.gt.f32.partialorder %v454, 0.0
    %v472 = vmul.f32 %v417, 0.01
    %v473 = vmul.f32 %v419, 0.01
    %v474 = vmul.f32 %v422, 0.01
    %v475 = vmul.f32 %v424, 0.01
    %v476 = vmul.f32 %v427, 0.01
    %v477 = vmul.f32 %v429, 0.01
    %v478 = vmul.f32 %v432, 0.01
    %v479 = vmul.f32 %v434, 0.01
    %v480 = vmul.f32 %v437, 0.01
    %v481 = vmul.f32 %v439, 0.01
    %v482 = vmul.f32 %v442, 0.01
    %v483 = vmul.f32 %v444, 0.01
    %v484 = vmul.f32 %v447, 0.01
    %v485 = vmul.f32 %v449, 0.01
    %v486 = vmul.f32 %v452, 0.01
    %v487 = vmul.f32 %v454, 0.01
    %v488 = vsel %vm456, %v417, %v472
    %v489 = vsel %vm457, %v419, %v473
    %v490 = vsel %vm458, %v422, %v474
    %v491 = vsel %vm459, %v424, %v475
    %v492 = vsel %vm460, %v427, %v476
    %v493 = vsel %vm461, %v429, %v477
    %v494 = vsel %vm462, %v432, %v478
    %v495 = vsel %vm463, %v434, %v479
    %v496 = vsel %vm464, %v437, %v480
    %v497 = vsel %vm465, %v439, %v481
    %v498 = vsel %vm466, %v442, %v482
    %v499 = vsel %vm467, %v444, %v483
    %v500 = vsel %vm468, %v447, %v484
    %v501 = vsel %vm469, %v449, %v485
    %v502 = vsel %vm470, %v452, %v486
    %v503 = vsel %vm471, %v454, %v487
    %v504 = vld [vmem:[%s6] sm:$0x1]
    %v505 = vpack.c.bf16 %v489, %v488
    %v506 = vpack.c.bf16 %v491, %v490
    %v507 = vpack.c.bf16 %v493, %v492
    %v508 = vpack.c.bf16 %v495, %v494
    %v509 = vpack.c.bf16 %v497, %v496
    %v510 = vpack.c.bf16 %v499, %v498
    %v511 = vpack.c.bf16 %v501, %v500
    %v512 = vpack.c.bf16 %v503, %v502
    %v513 = vld [vmem:[#allocation2] sm:$0x1]
    %515 = vset.pattern.permute.xlu0 0
    %516 = vperm.xlu0 %515, %v513
    %v517 = vpop.permute.xlu0 %516
    %v519 = vperm.slane %v517, 0
    %v521 = vsel %vm382, %v504, 0
    %v524 = vsel %vm382, %v505, 0
    %v527 = vsel %vm382, %v506, 0
    %v530 = vsel %vm382, %v507, 0
    %v533 = vsel %vm382, %v508, 0
    %v536 = vsel %vm382, %v509, 0
    %v539 = vsel %vm382, %v510, 0
    %v542 = vsel %vm382, %v511, 0
    %v545 = vsel %vm382, %v512, 0
    %547 = vmatpush.bf16.xpose.msra.mxu0 %v545
    %548 = vmatpush.bf16.xpose.msra.mxu0 %v542
    %549 = vmatpush.bf16.xpose.msra.mxu0 %v539
    %550 = vmatpush.bf16.xpose.msra.mxu0 %v536
    %551 = vmatpush.bf16.xpose.msra.mxu0 %v533
    %552 = vmatpush.bf16.xpose.msra.mxu0 %v530
    %553 = vmatpush.bf16.xpose.msra.mxu0 %v527
    %554 = vmatpush.bf16.xpose.msra.mxu0 %v524
    %555 = vmatmul.bf16.gmra.mxu0 %v521
    %v556 = vpop.f32.mrf.mxu0
    %v557 = vadd.f32 %v519, %v556
    %v558 = vpop.f32.mrf.mxu0
    %559 = vdwg.mxu0
    %560 = vst [vmem:[#allocation3] sm:$0x1] %v557
    // Predicated region
    $region34: #{_forward_jit.1} parent=1 // pred_check
      _
    $region35: #{_forward_jit.1} parent=1 // pred_check_branch
      %562 = sbr.rel (0) target = $region37
    $region36: #{_forward_jit.1} parent=1 // pred_region
      %564 = vsyncadd [#allocation4], 0
      %s566 = sshll.u32 [#allocation3], 4
      %s567 = int_to_ptr.vmem [resolvable:$true] %s566
      %s568 = sshll.u32 %s8, 4
      %s569 = int_to_ptr.hbm [resolvable:$true] %s568
      %571 = dma.vmem_to_hbm [thread:$0]  %s567, 16, %s569, [#allocation4]
    $region37: #{_forward_jit.1} parent=1 // pred_fallthru
      _
    // Predicated region
    $region38: #{_forward_jit.1} parent=1 // pred_check
      _
    $region39: #{_forward_jit.1} parent=1 // pred_check_branch
      %573 = sbr.rel (0) target = $region41
    $region40: #{_forward_jit.1} parent=1 // pred_region
      %575 = dma.done [#allocation4], 16
    $region41: #{_forward_jit.1} parent=1 // pred_fallthru
      _
    %576 = vsyncpa [#allocation4], 1

</llo_original>
